<compile_context>
chip_gen: v7x
topology: tpu7x:2x2x1
jax: 0.10.0
libtpu: 0.0.40
codegen_flags: <defaults>
</compile_context>

<pallas_src>
import functools

import jax
import jax.numpy as jnp
from jax.experimental import pallas as pl
from jax.experimental.pallas import tpu as pltpu

_PER_BUFFER_BYTES = 6 * 1024 * 1024     # budget for one input tile (double-buffered by Pallas)
_VMEM_LIMIT_BYTES = 32 * 1024 * 1024    # conservative: fits v5e/v6e/v7x scoped VMEM


def _ce_ls_kernel(inputs_ref, targets_ref, out_ref, *,
                  epsilon, num_classes, applied_softmax, int_labels):
    """One grid step over a (TB, K) row tile.

    inputs_ref : (TB, K) float   -- probabilities (applied_softmax=True) or logits
    targets_ref: (TB, 1) int32   -- class indices      (int_labels=True)
                 (TB, K) float   -- soft/one-hot labels (int_labels=False)
    out_ref    : (TB, 1) float32 -- per-sample smoothed CE loss
    """
    x = inputs_ref[...].astype(jnp.float32)                       # (TB, K)
    TB, K = x.shape

    if applied_softmax:
        # Faithful to torch.log(inputs): an exactly-zero probability gives -inf,
        # exactly as in the PyTorch module.
        log_probs = jnp.log(x)
    else:
        # nn.LogSoftmax(dim=-1)
        m = jnp.max(x, axis=-1, keepdims=True)
        z = x - m
        log_probs = z - jnp.log(jnp.sum(jnp.exp(z), axis=-1, keepdims=True))

    # Folded label smoothing:
    #   loss_i = -(1-eps) * sum_k y_ik * lp_ik  -  (eps/K) * sum_k lp_ik
    row_sum_lp = jnp.sum(log_probs, axis=-1, keepdims=True)       # (TB, 1)

    if int_labels:
        labels = targets_ref[...]                                  # (TB, 1) int32
        classes = jax.lax.broadcasted_iota(jnp.int32, (TB, K), 1)
        label_lp = jnp.sum(jnp.where(classes == labels, log_probs, 0.0),
                           axis=-1, keepdims=True)                 # (TB, 1)
    else:
        t = targets_ref[...].astype(jnp.float32)
        label_lp = jnp.sum(t * log_probs, axis=-1, keepdims=True)  # (TB, 1)

    out_ref[...] = (-(1.0 - epsilon) * label_lp
                    - (epsilon / num_classes) * row_sum_lp)


def _round_up(x, m):
    return (x + m - 1) // m * m


def cross_entropy_label_smooth(inputs, targets, *, num_classes, epsilon=0.1,
                               reduction=True, applied_softmax=True):
    """JAX/Pallas equivalent of CrossEntropyLabelSmooth.forward."""
    B, K = inputs.shape
    assert K == num_classes, "class dim must equal num_classes"

    int_labels = tuple(targets.shape) != tuple(inputs.shape)

    # --- tile-size selection: largest row count whose tile fits the VMEM budget ---
    itemsize = jnp.dtype(inputs.dtype).itemsize
    max_rows = max(8, (_PER_BUFFER_BYTES // max(1, K * itemsize)) // 8 * 8)
    tb = min(max_rows, _round_up(B, 8))        # rows per tile, multiple of 8
    grid = (pl.cdiv(B, tb),)

    in_spec = pl.BlockSpec((tb, K), lambda i: (i, 0))
    if int_labels:
        targets_arr = targets.astype(jnp.int32).reshape(B, 1)
        tgt_spec = pl.BlockSpec((tb, 1), lambda i: (i, 0))
    else:
        targets_arr = targets                  # keep native dtype; cast in-kernel
        tgt_spec = pl.BlockSpec((tb, K), lambda i: (i, 0))

    kernel = functools.partial(
        _ce_ls_kernel,
        epsilon=float(epsilon),
        num_classes=num_classes,
        applied_softmax=applied_softmax,
        int_labels=int_labels,
    )

    per_sample = pl.pallas_call(
        kernel,
        out_shape=jax.ShapeDtypeStruct((B, 1), jnp.float32),
        grid=grid,
        in_specs=[in_spec, tgt_spec],
        out_specs=pl.BlockSpec((tb, 1), lambda i: (i, 0)),
        compiler_params=pltpu.CompilerParams(
            dimension_semantics=("parallel",),
            vmem_limit_bytes=_VMEM_LIMIT_BYTES),
    )(inputs, targets_arr)                      # NOTE: no wrapper dtype cast

    if reduction:
        return jnp.mean(per_sample[:, 0])       # loss.mean()
    return per_sample[:, 0]                     # per-sample loss, shape (B,)


if __name__ == "__main__":
    key = jax.random.PRNGKey(0)
    k1, k2 = jax.random.split(key)

    batch, num_classes = 8, 16
    epsilon = 0.1

    logits = jax.random.normal(k1, (batch, num_classes), dtype=jnp.float32)
    probs = jax.nn.softmax(logits, axis=-1)                       # "applied_softmax" inputs
    labels = jax.random.randint(k2, (batch,), 0, num_classes, dtype=jnp.int32)
    onehot = jax.nn.one_hot(labels, num_classes, dtype=jnp.float32)

    def ref_loss(log_probs, tgt, reduction=True):
        smoothed = (1.0 - epsilon) * tgt + epsilon / num_classes
        loss = jnp.sum(-smoothed * log_probs, axis=1)
        return jnp.mean(loss) if reduction else loss

    # 1) Default path: probabilities in, int labels, mean reduction.
    loss = cross_entropy_label_smooth(
        probs, labels, num_classes=num_classes, epsilon=epsilon,
        reduction=True, applied_softmax=True)
    loss = jax.block_until_ready(loss)
    ref = ref_loss(jnp.log(probs), onehot)
    assert jnp.allclose(loss, ref, atol=1e-5, rtol=1e-5), (loss, ref)

    # 2) Per-sample (reduction=False) path.
    per_sample = cross_entropy_label_smooth(
        probs, labels, num_classes=num_classes, epsilon=epsilon,
        reduction=False, applied_softmax=True)
    per_sample = jax.block_until_ready(per_sample)
    assert per_sample.shape == (batch,)
    assert jnp.allclose(per_sample, ref_loss(jnp.log(probs), onehot, reduction=False),
                        atol=1e-5, rtol=1e-5)

    # 3) Logits path (applied_softmax=False -> in-kernel log-softmax).
    loss_logits = cross_entropy_label_smooth(
        logits, labels, num_classes=num_classes, epsilon=epsilon,
        reduction=True, applied_softmax=False)
    loss_logits = jax.block_until_ready(loss_logits)
    ref_logits = ref_loss(jax.nn.log_softmax(logits, axis=-1), onehot)
    assert jnp.allclose(loss_logits, ref_logits, atol=1e-5, rtol=1e-5), (loss_logits, ref_logits)

    # 4) Dense (soft / one-hot float) targets path (targets.shape == inputs.shape).
    loss_soft = cross_entropy_label_smooth(
        probs, onehot, num_classes=num_classes, epsilon=epsilon,
        reduction=True, applied_softmax=True)
    loss_soft = jax.block_until_ready(loss_soft)
    assert jnp.allclose(loss_soft, ref, atol=1e-5, rtol=1e-5), (loss_soft, ref)

    print("KERNEL_OK")
</pallas_src>

<mosaic_0001>
module attributes {stable_mosaic.version = 11 : i64} {
  func.func @_ce_ls_kernel(%arg0: i32, %arg1: memref<8x16xf32, #tpu.memory_space<vmem>>, %arg2: memref<8x1xi32, #tpu.memory_space<vmem>>, %arg3: memref<8x1xf32, #tpu.memory_space<vmem>>) attributes {dimension_semantics = [#tpu.dimension_semantics<parallel>], iteration_bounds = array<i64: 1>, scalar_prefetch = 0 : i64, scratch_operands = 0 : i64, tpu.core_type = #tpu.core_type<tc>, window_params = [{transform_indices = @transform_0, window_bounds = array<i64: 8, 16>}, {transform_indices = @transform_1, window_bounds = array<i64: 8, 1>}, {transform_indices = @transform_2, window_bounds = array<i64: 8, 1>}]} {
    %c0 = arith.constant 0 : index
    %c0_0 = arith.constant 0 : index
    %0 = vector.load %arg1[%c0, %c0_0] : memref<8x16xf32, #tpu.memory_space<vmem>>, vector<8x16xf32>
    %1 = math.log %0 : vector<8x16xf32>
    %cst = arith.constant dense<0.000000e+00> : vector<8xf32>
    %2 = vector.multi_reduction <add>, %1, %cst [1] : vector<8x16xf32> to vector<8xf32>
    %3 = vector.shape_cast %2 : vector<8xf32> to vector<8x1xf32>
    %c0_1 = arith.constant 0 : index
    %c0_2 = arith.constant 0 : index
    %4 = vector.load %arg2[%c0_1, %c0_2] : memref<8x1xi32, #tpu.memory_space<vmem>>, vector<8x1xi32>
    %5 = tpu.iota {dimensions = array<i32: 1>} : vector<8x16xi32>
    %6 = vector.broadcast %4 : vector<8x1xi32> to vector<8x16xi32>
    %7 = arith.cmpi eq, %5, %6 : vector<8x16xi32>
    %cst_3 = arith.constant 0.000000e+00 : f32
    %8 = vector.broadcast %cst_3 : f32 to vector<8x16xf32>
    %9 = arith.select %7, %1, %8 : vector<8x16xi1>, vector<8x16xf32>
    %cst_4 = arith.constant dense<0.000000e+00> : vector<8xf32>
    %10 = vector.multi_reduction <add>, %9, %cst_4 [1] : vector<8x16xf32> to vector<8xf32>
    %11 = vector.shape_cast %10 : vector<8xf32> to vector<8x1xf32>
    %cst_5 = arith.constant -0.899999976 : f32
    %12 = vector.broadcast %cst_5 : f32 to vector<8x1xf32>
    %13 = arith.mulf %12, %11 : vector<8x1xf32>
    %cst_6 = arith.constant 6.250000e-03 : f32
    %14 = vector.broadcast %cst_6 : f32 to vector<8x1xf32>
    %15 = arith.mulf %14, %3 : vector<8x1xf32>
    %16 = arith.subf %13, %15 : vector<8x1xf32>
    %c0_7 = arith.constant 0 : index
    %c0_8 = arith.constant 0 : index
    %17 = vector.load %arg3[%c0_7, %c0_8] : memref<8x1xf32, #tpu.memory_space<vmem>>, vector<8x1xf32>
    tpu.vector_store %arg3[%c0_7, %c0_8], %16 {strides = array<i32>} : memref<8x1xf32, #tpu.memory_space<vmem>>, vector<8x1xf32>,
    return
  }
  func.func @transform_0(%arg0: i32) -> (i32, i32) {
    %c0_i32 = arith.constant 0 : i32
    %c0_i32_0 = arith.constant 0 : i32
    return %arg0, %c0_i32 : i32, i32
  }
  func.func @transform_1(%arg0: i32) -> (i32, i32) {
    %c0_i32 = arith.constant 0 : i32
    %c0_i32_0 = arith.constant 0 : i32
    return %arg0, %c0_i32 : i32, i32
  }
  func.func @transform_2(%arg0: i32) -> (i32, i32) {
    %c0_i32 = arith.constant 0 : i32
    %c0_i32_0 = arith.constant 0 : i32
    return %arg0, %c0_i32 : i32, i32
  }
}

</mosaic_0001>

<llo_original>
// kernel: tpu_custom_call.1
$region0: #{tpu_custom_call.1}
  #allocation0 [shape = 'u32[]', space=smem, size = 0x4, offset = 0x4, fixed_abs, tag = 'smem constant byte address 0x4 - core index']
  #allocation1 [shape = 'u32[144,128]{1,0:T(1,128)}', space=vmem, size = 0x12000, scoped, tag = 'internal scratch']
  %s0 = inlined_call_operand.vmem [shape: f32[8,16], index: 0, kind: input, shape index: {}]
  %s1 = inlined_call_operand.vmem [shape: s32[8,1], index: 1, kind: input, shape index: {}]
  %s2 = inlined_call_operand.vmem [shape: f32[8,1], index: 2, kind: output, shape index: {}]
  %s3 = sld [smem:[#allocation0]]
  $region18: #{tpu_custom_call.1} parent=0
    _
  %s5 = ssub.s32 1, %s3
  %s6 = scalar_select 0, %s5, %s3
  // Predicated region
  $region2: #{tpu_custom_call.1} parent=0 // pred_check
    _
  $region3: #{tpu_custom_call.1} parent=0 // pred_check_branch
    %8 = sbr.rel (0) target = $region5
  $region4: #{tpu_custom_call.1} parent=0 // pred_region
    _
  $region5: #{tpu_custom_call.1} parent=0 // pred_fallthru
    _
  // Predicated region
  $region6: #{tpu_custom_call.1} parent=0 // pred_check
    _
  $region7: #{tpu_custom_call.1} parent=0 // pred_check_branch
    %10 = sbr.rel (0) target = $region9
  $region8: #{tpu_custom_call.1} parent=0 // pred_region
    _
  $region9: #{tpu_custom_call.1} parent=0 // pred_fallthru
    _
  %v11 = vld [vmem:[%s0] sm:$0xff]
  %v12 = vlog2.pop %v11
  %v13 = vmul.f32 %v12, 0.6931472
  %vm14 = vcmask 130048
  %v15 = vsel %vm14, %v13, 0.0
  %16 = vadd.xlane.f32.xlu0 %v15
  %v17 = vpop.xlane.xlu0 %16
  %v18 = vld [vmem:[%s1] sm:$0xff]
  %v19 = vlaneseq
  %v20 = vand.u32 %v19, 127
  %21 = vset.pattern.permute.xlu0 0
  %22 = vperm.xlu0 %21, %v18
  %v23 = vpop.permute.xlu0 %22
  %vm24 = vcmp.eq.s32.totalorder %v20, %v23
  %v25 = vsel %vm24, %v13, 0.0
  %v26 = vsel %vm14, %v25, 0.0
  %27 = vadd.xlane.f32.xlu0 %v26
  %v28 = vpop.xlane.xlu0 %27
  %v29 = vmul.f32 %v28, -0.9
  %v30 = vmul.f32 %v17, 0.00625
  %v31 = vsub.f32 %v29, %v30
  %vm32 = vcmask 7168
  %33 = vst.msk [vmem:[%s2] sm:$0xff] %vm32, %v31
  // Predicated region
  $region10: #{tpu_custom_call.1} parent=0 // pred_check
    _
  $region11: #{tpu_custom_call.1} parent=0 // pred_check_branch
    %35 = sbr.rel (0) target = $region13
  $region12: #{tpu_custom_call.1} parent=0 // pred_region
    _
  $region13: #{tpu_custom_call.1} parent=0 // pred_fallthru
    _
  // Predicated region
  $region14: #{tpu_custom_call.1} parent=0 // pred_check
    _
  $region15: #{tpu_custom_call.1} parent=0 // pred_check_branch
    %37 = sbr.rel (0) target = $region17
  $region16: #{tpu_custom_call.1} parent=0 // pred_region
    _
  $region17: #{tpu_custom_call.1} parent=0 // pred_fallthru
    _

</llo_original>
